<compile_context>
chip_gen: v7x
topology: tpu7x:2x2x1
jax: 0.10.0
libtpu: 0.0.40
codegen_flags: <defaults>
</compile_context>

<pallas_src>
import jax
import jax.numpy as jnp
from jax import lax
from jax.experimental import pallas as pl
from jax.experimental.pallas import tpu as pltpu

ITERATIONS = 24
IN_DIM = ITERATIONS * 6          # 144
HIDDEN = (128, 256, 64)
OUT_DIM = 6
OUT_PAD = 8                      # last layer zero-padded to an 8-sublane slab
TM_MAX = 2048                    # respects v5e's 16 MiB scoped-VMEM default


def _round_up(x, m):
    return ((x + m - 1) // m) * m


def mlp_kernel(x_ref,
               w1_ref, b1_ref,
               w2_ref, b2_ref,
               w3_ref, b3_ref,
               w4t_ref, b4t_ref,
               o_ref):
    # In-kernel f32 -> bf16 cast of the input tile (VPU has slack; avoids a
    # separate wrapper-side XLA cast pass over the (B, 144) input in HBM).
    x = x_ref[...].astype(jnp.bfloat16)

    h = jnp.dot(x, w1_ref[...], preferred_element_type=jnp.float32) + b1_ref[...]
    h = jnp.maximum(h, 0.0).astype(jnp.bfloat16)

    h = jnp.dot(h, w2_ref[...], preferred_element_type=jnp.float32) + b2_ref[...]
    h = jnp.maximum(h, 0.0).astype(jnp.bfloat16)

    h = jnp.dot(h, w3_ref[...], preferred_element_type=jnp.float32) + b3_ref[...]
    h = jnp.maximum(h, 0.0).astype(jnp.bfloat16)

    # Final Linear(64 -> 6), computed transposed via dot_general contracting
    # the 64-dim of both operands: (OUT_PAD, 64) x (TM, 64) -> (OUT_PAD, TM).
    # TM lands on the lane dim -> unmasked, contiguous stores.
    out_t = lax.dot_general(w4t_ref[...], h,
                            dimension_numbers=(((1,), (1,)), ((), ())),
                            preferred_element_type=jnp.float32)
    o_ref[...] = (out_t + b4t_ref[...]).astype(o_ref.dtype)


def init_params(key):
    """Mirror nn.Linear default init: U(-1/sqrt(fan_in), +1/sqrt(fan_in)), f32."""
    dims = (IN_DIM,) + HIDDEN + (OUT_DIM,)
    params = []
    for i in range(len(dims) - 1):
        fan_in, fan_out = dims[i], dims[i + 1]
        key, kw, kb = jax.random.split(key, 3)
        bound = 1.0 / (fan_in ** 0.5)
        w = jax.random.uniform(kw, (fan_in, fan_out), jnp.float32, -bound, bound)
        b = jax.random.uniform(kb, (1, fan_out), jnp.float32, -bound, bound)
        params.append((w, b))
    return params


def prepare_params(params):
    """One-time conversion to kernel layout: bf16 weights, f32 biases,
    last layer pre-transposed and zero-padded to OUT_PAD rows."""
    (w1, b1), (w2, b2), (w3, b3), (w4, b4) = params
    w1, w2, w3 = (w.astype(jnp.bfloat16) for w in (w1, w2, w3))
    w4t = jnp.zeros((OUT_PAD, w4.shape[0]), jnp.bfloat16)
    w4t = w4t.at[:OUT_DIM].set(w4.T.astype(jnp.bfloat16))
    b4t = jnp.zeros((OUT_PAD, 1), jnp.float32).at[:OUT_DIM].set(b4.reshape(-1, 1))
    return [(w1, b1), (w2, b2), (w3, b3), (w4t, b4t)]


def _flatten_inputs(x):
    """torch.cat(x, dim=1) equivalent: one stack + one reshape."""
    if isinstance(x, (list, tuple)):
        x = jnp.stack(x, axis=1)          # (B, ITERATIONS, 6)
    return x.reshape(x.shape[0], IN_DIM)  # (B, 144)


def _choose_tm(batch):
    if batch <= 512:
        return batch                      # single tile, full-dims block
    # >=2 grid steps (v7x megacore), tile a multiple of 512, capped at TM_MAX.
    return min(TM_MAX, _round_up(pl.cdiv(batch, 2), 512))


def choice_model_forward(x, kparams):
    """x: list of ITERATIONS arrays (B, 6) OR a stacked (B, ITERATIONS, 6) array.
    kparams: output of prepare_params. Returns (B, 6) f32."""
    x = _flatten_inputs(x)                # (B, 144) f32 — cast to bf16 in-kernel
    B = x.shape[0]
    tm = _choose_tm(B)
    grid = (pl.cdiv(B, tm),)

    (w1, b1), (w2, b2), (w3, b3), (w4t, b4t) = kparams
    const = lambda i: (0, 0)              # weights/biases: resident in VMEM
    weight_specs = [
        pl.BlockSpec(w1.shape, const), pl.BlockSpec(b1.shape, const),
        pl.BlockSpec(w2.shape, const), pl.BlockSpec(b2.shape, const),
        pl.BlockSpec(w3.shape, const), pl.BlockSpec(b3.shape, const),
        pl.BlockSpec(w4t.shape, const), pl.BlockSpec(b4t.shape, const),
    ]

    out_t = pl.pallas_call(
        mlp_kernel,
        out_shape=jax.ShapeDtypeStruct((OUT_PAD, B), jnp.float32),
        grid=grid,
        in_specs=[pl.BlockSpec((tm, IN_DIM), lambda i: (i, 0))] + weight_specs,
        out_specs=pl.BlockSpec((OUT_PAD, tm), lambda i: (0, i)),
        compiler_params=pltpu.CompilerParams(
            dimension_semantics=("parallel",)),   # megacore sharding on v7x
    )(x, w1, b1, w2, b2, w3, b3, w4t, b4t)

    # (OUT_PAD, B) -> (B, 6). Tiny vs. the input HBM pass; consumers happy with
    # feature-major output can use out_t[:OUT_DIM] directly and skip this.
    return out_t[:OUT_DIM, :].T


def reference_forward(x, params, *, bf16_operands=True):
    """Pure-JAX reference. bf16_operands=True mirrors the kernel precision path."""
    h = _flatten_inputs(x)
    cast = (lambda a: a.astype(jnp.bfloat16)) if bf16_operands else (lambda a: a)
    h = cast(h)
    layers = list(params)
    for idx, (w, b) in enumerate(layers):
        h = jnp.dot(h, cast(w), preferred_element_type=jnp.float32) + b
        if idx < len(layers) - 1:
            h = jnp.maximum(h, 0.0)
            h = cast(h)
    return h


if __name__ == "__main__":
    key = jax.random.PRNGKey(0)
    key, pkey = jax.random.split(key)
    params = init_params(pkey)          # f32 "torch-like" params
    kparams = prepare_params(params)    # bf16/transposed kernel params (one-time)

    # --- small batch, list-of-(B, 6) inputs (matches torch forward signature) ---
    B = 8
    key, xkey = jax.random.split(key)
    x_list = [jax.random.normal(k, (B, 6), jnp.float32)
              for k in jax.random.split(xkey, ITERATIONS)]
    out = jax.block_until_ready(choice_model_forward(x_list, kparams))
    assert out.shape == (B, OUT_DIM)
    ref_bf16 = reference_forward(x_list, params, bf16_operands=True)
    ref_f32 = reference_forward(x_list, params, bf16_operands=False)
    assert jnp.allclose(out, ref_bf16, atol=2e-3, rtol=2e-3)
    assert jnp.allclose(out, ref_f32, atol=5e-2, rtol=5e-2)

    # --- larger batch, pre-stacked (B, 24, 6): exercises multi-step grid and
    #     the clipped partial boundary block (no pad, no output slice) ---
    B2 = 1000
    key, xkey2 = jax.random.split(key)
    x_big = jax.random.normal(xkey2, (B2, ITERATIONS, 6), jnp.float32)
    out2 = jax.block_until_ready(choice_model_forward(x_big, kparams))
    assert out2.shape == (B2, OUT_DIM)
    ref2 = reference_forward(x_big, params, bf16_operands=True)
    assert jnp.allclose(out2, ref2, atol=2e-3, rtol=2e-3)

    print("KERNEL_OK")
</pallas_src>

<mosaic_0001>
module attributes {stable_mosaic.version = 11 : i64} {
  func.func @mlp_kernel(%arg0: i32, %arg1: memref<8x144xf32, #tpu.memory_space<vmem>>, %arg2: memref<144x128xbf16, #tpu.memory_space<vmem>>, %arg3: memref<1x128xf32, #tpu.memory_space<vmem>>, %arg4: memref<128x256xbf16, #tpu.memory_space<vmem>>, %arg5: memref<1x256xf32, #tpu.memory_space<vmem>>, %arg6: memref<256x64xbf16, #tpu.memory_space<vmem>>, %arg7: memref<1x64xf32, #tpu.memory_space<vmem>>, %arg8: memref<8x64xbf16, #tpu.memory_space<vmem>>, %arg9: memref<8x1xf32, #tpu.memory_space<vmem>>, %arg10: memref<8x8xf32, #tpu.memory_space<vmem>>) attributes {dimension_semantics = [#tpu.dimension_semantics<parallel>], iteration_bounds = array<i64: 1>, scalar_prefetch = 0 : i64, scratch_operands = 0 : i64, tpu.core_type = #tpu.core_type<tc>, window_params = [{transform_indices = @transform_0, window_bounds = array<i64: 8, 144>}, {pipeline_mode = #tpu.pipeline_mode<synchronous>, transform_indices = @transform_1, window_bounds = array<i64: 144, 128>}, {pipeline_mode = #tpu.pipeline_mode<synchronous>, transform_indices = @transform_2, window_bounds = array<i64: 1, 128>}, {pipeline_mode = #tpu.pipeline_mode<synchronous>, transform_indices = @transform_3, window_bounds = array<i64: 128, 256>}, {pipeline_mode = #tpu.pipeline_mode<synchronous>, transform_indices = @transform_4, window_bounds = array<i64: 1, 256>}, {pipeline_mode = #tpu.pipeline_mode<synchronous>, transform_indices = @transform_5, window_bounds = array<i64: 256, 64>}, {pipeline_mode = #tpu.pipeline_mode<synchronous>, transform_indices = @transform_6, window_bounds = array<i64: 1, 64>}, {pipeline_mode = #tpu.pipeline_mode<synchronous>, transform_indices = @transform_7, window_bounds = array<i64: 8, 64>}, {pipeline_mode = #tpu.pipeline_mode<synchronous>, transform_indices = @transform_8, window_bounds = array<i64: 8, 1>}, {transform_indices = @transform_9, window_bounds = array<i64: 8, 8>}]} {
    %c0 = arith.constant 0 : index
    %c0_0 = arith.constant 0 : index
    %0 = vector.load %arg1[%c0, %c0_0] : memref<8x144xf32, #tpu.memory_space<vmem>>, vector<8x144xf32>
    %1 = arith.truncf %0 : vector<8x144xf32> to vector<8x144xbf16>
    %c0_1 = arith.constant 0 : index
    %c0_2 = arith.constant 0 : index
    %2 = vector.load %arg2[%c0_1, %c0_2] : memref<144x128xbf16, #tpu.memory_space<vmem>>, vector<144x128xbf16>
    %cst = arith.constant dense<0.000000e+00> : vector<8x128xf32>
    %3 = tpu.matmul %1, %2, %cst {dimension_numbers = #tpu.dot_dimension_numbers<[1], [0], [0], [1], [0, 0, 1, 1], [], []>} : vector<8x144xbf16>, vector<144x128xbf16>, vector<8x128xf32> -> vector<8x128xf32>
    %c0_3 = arith.constant 0 : index
    %c0_4 = arith.constant 0 : index
    %4 = vector.load %arg3[%c0_3, %c0_4] : memref<1x128xf32, #tpu.memory_space<vmem>>, vector<1x128xf32>
    %5 = vector.broadcast %4 : vector<1x128xf32> to vector<8x128xf32>
    %6 = arith.addf %3, %5 : vector<8x128xf32>
    %cst_5 = arith.constant 0.000000e+00 : f32
    %7 = vector.broadcast %cst_5 : f32 to vector<8x128xf32>
    %8 = arith.maximumf %6, %7 : vector<8x128xf32>
    %9 = arith.truncf %8 : vector<8x128xf32> to vector<8x128xbf16>
    %c0_6 = arith.constant 0 : index
    %c0_7 = arith.constant 0 : index
    %10 = vector.load %arg4[%c0_6, %c0_7] : memref<128x256xbf16, #tpu.memory_space<vmem>>, vector<128x256xbf16>
    %cst_8 = arith.constant dense<0.000000e+00> : vector<8x256xf32>
    %11 = tpu.matmul %9, %10, %cst_8 {dimension_numbers = #tpu.dot_dimension_numbers<[1], [0], [0], [1], [0, 0, 1, 1], [], []>} : vector<8x128xbf16>, vector<128x256xbf16>, vector<8x256xf32> -> vector<8x256xf32>
    %c0_9 = arith.constant 0 : index
    %c0_10 = arith.constant 0 : index
    %12 = vector.load %arg5[%c0_9, %c0_10] : memref<1x256xf32, #tpu.memory_space<vmem>>, vector<1x256xf32>
    %13 = vector.broadcast %12 : vector<1x256xf32> to vector<8x256xf32>
    %14 = arith.addf %11, %13 : vector<8x256xf32>
    %cst_11 = arith.constant 0.000000e+00 : f32
    %15 = vector.broadcast %cst_11 : f32 to vector<8x256xf32>
    %16 = arith.maximumf %14, %15 : vector<8x256xf32>
    %17 = arith.truncf %16 : vector<8x256xf32> to vector<8x256xbf16>
    %c0_12 = arith.constant 0 : index
    %c0_13 = arith.constant 0 : index
    %18 = vector.load %arg6[%c0_12, %c0_13] : memref<256x64xbf16, #tpu.memory_space<vmem>>, vector<256x64xbf16>
    %cst_14 = arith.constant dense<0.000000e+00> : vector<8x64xf32>
    %19 = tpu.matmul %17, %18, %cst_14 {dimension_numbers = #tpu.dot_dimension_numbers<[1], [0], [0], [1], [0, 0, 1, 1], [], []>} : vector<8x256xbf16>, vector<256x64xbf16>, vector<8x64xf32> -> vector<8x64xf32>
    %c0_15 = arith.constant 0 : index
    %c0_16 = arith.constant 0 : index
    %20 = vector.load %arg7[%c0_15, %c0_16] : memref<1x64xf32, #tpu.memory_space<vmem>>, vector<1x64xf32>
    %21 = vector.broadcast %20 : vector<1x64xf32> to vector<8x64xf32>
    %22 = arith.addf %19, %21 : vector<8x64xf32>
    %cst_17 = arith.constant 0.000000e+00 : f32
    %23 = vector.broadcast %cst_17 : f32 to vector<8x64xf32>
    %24 = arith.maximumf %22, %23 : vector<8x64xf32>
    %25 = arith.truncf %24 : vector<8x64xf32> to vector<8x64xbf16>
    %c0_18 = arith.constant 0 : index
    %c0_19 = arith.constant 0 : index
    %26 = vector.load %arg8[%c0_18, %c0_19] : memref<8x64xbf16, #tpu.memory_space<vmem>>, vector<8x64xbf16>
    %cst_20 = arith.constant dense<0.000000e+00> : vector<8x8xf32>
    %27 = tpu.matmul %26, %25, %cst_20 {dimension_numbers = #tpu.dot_dimension_numbers<[1], [1], [0], [0], [0, 0, 1, 0], [], []>} : vector<8x64xbf16>, vector<8x64xbf16>, vector<8x8xf32> -> vector<8x8xf32>
    %c0_21 = arith.constant 0 : index
    %c0_22 = arith.constant 0 : index
    %28 = vector.load %arg9[%c0_21, %c0_22] : memref<8x1xf32, #tpu.memory_space<vmem>>, vector<8x1xf32>
    %29 = vector.broadcast %28 : vector<8x1xf32> to vector<8x8xf32>
    %30 = arith.addf %27, %29 : vector<8x8xf32>
    %c0_23 = arith.constant 0 : index
    %c0_24 = arith.constant 0 : index
    %31 = vector.load %arg10[%c0_23, %c0_24] : memref<8x8xf32, #tpu.memory_space<vmem>>, vector<8x8xf32>
    tpu.vector_store %arg10[%c0_23, %c0_24], %30 {strides = array<i32>} : memref<8x8xf32, #tpu.memory_space<vmem>>, vector<8x8xf32>,
    return
  }
  func.func @transform_0(%arg0: i32) -> (i32, i32) {
    %c0_i32 = arith.constant 0 : i32
    %c0_i32_0 = arith.constant 0 : i32
    return %arg0, %c0_i32 : i32, i32
  }
  func.func @transform_1(%arg0: i32) -> (i32, i32) {
    %c0_i32 = arith.constant 0 : i32
    %c0_i32_0 = arith.constant 0 : i32
    %c0_i32_1 = arith.constant 0 : i32
    return %c0_i32, %c0_i32_0 : i32, i32
  }
  func.func @transform_2(%arg0: i32) -> (i32, i32) {
    %c0_i32 = arith.constant 0 : i32
    %c0_i32_0 = arith.constant 0 : i32
    %c0_i32_1 = arith.constant 0 : i32
    return %c0_i32, %c0_i32_0 : i32, i32
  }
  func.func @transform_3(%arg0: i32) -> (i32, i32) {
    %c0_i32 = arith.constant 0 : i32
    %c0_i32_0 = arith.constant 0 : i32
    %c0_i32_1 = arith.constant 0 : i32
    return %c0_i32, %c0_i32_0 : i32, i32
  }
  func.func @transform_4(%arg0: i32) -> (i32, i32) {
    %c0_i32 = arith.constant 0 : i32
    %c0_i32_0 = arith.constant 0 : i32
    %c0_i32_1 = arith.constant 0 : i32
    return %c0_i32, %c0_i32_0 : i32, i32
  }
  func.func @transform_5(%arg0: i32) -> (i32, i32) {
    %c0_i32 = arith.constant 0 : i32
    %c0_i32_0 = arith.constant 0 : i32
    %c0_i32_1 = arith.constant 0 : i32
    return %c0_i32, %c0_i32_0 : i32, i32
  }
  func.func @transform_6(%arg0: i32) -> (i32, i32) {
    %c0_i32 = arith.constant 0 : i32
    %c0_i32_0 = arith.constant 0 : i32
    %c0_i32_1 = arith.constant 0 : i32
    return %c0_i32, %c0_i32_0 : i32, i32
  }
  func.func @transform_7(%arg0: i32) -> (i32, i32) {
    %c0_i32 = arith.constant 0 : i32
    %c0_i32_0 = arith.constant 0 : i32
    %c0_i32_1 = arith.constant 0 : i32
    return %c0_i32, %c0_i32_0 : i32, i32
  }
  func.func @transform_8(%arg0: i32) -> (i32, i32) {
    %c0_i32 = arith.constant 0 : i32
    %c0_i32_0 = arith.constant 0 : i32
    %c0_i32_1 = arith.constant 0 : i32
    return %c0_i32, %c0_i32_0 : i32, i32
  }
  func.func @transform_9(%arg0: i32) -> (i32, i32) {
    %c0_i32 = arith.constant 0 : i32
    %c0_i32_0 = arith.constant 0 : i32
    return %c0_i32, %arg0 : i32, i32
  }
}

</mosaic_0001>

<llo_original>
// kernel: tpu_custom_call.1
$region0: #{tpu_custom_call.1}
  #allocation0 [shape = 'u32[]', space=smem, size = 0x4, offset = 0x4, fixed_abs, tag = 'smem constant byte address 0x4 - core index']
  #allocation1 [shape = 'u32[144,128]{1,0:T(1,128)}', space=vmem, size = 0x12000, scoped, tag = 'internal scratch']
  %s0 = inlined_call_operand.hbm [shape: f32[8,144], index: 0, kind: input, shape index: {}]
  %s1 = inlined_call_operand.vmem [shape: bf16[144,128], index: 1, kind: input, shape index: {}]
  %s2 = inlined_call_operand.vmem [shape: f32[1,128], index: 2, kind: input, shape index: {}]
  %s3 = inlined_call_operand.vmem [shape: bf16[128,256], index: 3, kind: input, shape index: {}]
  %s4 = inlined_call_operand.vmem [shape: f32[1,256], index: 4, kind: input, shape index: {}]
  %s5 = inlined_call_operand.vmem [shape: bf16[256,64], index: 5, kind: input, shape index: {}]
  %s6 = inlined_call_operand.vmem [shape: f32[1,64], index: 6, kind: input, shape index: {}]
  %s7 = inlined_call_operand.vmem [shape: bf16[8,64], index: 7, kind: input, shape index: {}]
  %s8 = inlined_call_operand.vmem [shape: f32[8,1], index: 8, kind: input, shape index: {}]
  %s9 = inlined_call_operand.hbm [shape: f32[8,8], index: 9, kind: output, shape index: {}]
  %s10 = sld [smem:[#allocation0]]
  $region50: #{tpu_custom_call.1} parent=0
    _
  %s12 = ssub.s32 1, %s10
  %s13 = scalar_select 0, %s12, %s10
  $region1: #{tpu_custom_call.1} parent=0
    #allocation2 [shape = 'u8[8192]{0}', space=vmem, size = 0x2000, scoped, tag = 'input window, operand 0, single buffered']
    #allocation3 [shape = 's32[1]{0}', space=sflag, size = 0x4, scoped, tag = 'scoped memory for tpu_custom_call.1']
    #allocation4 [shape = 's32[1]{0}', space=sflag, size = 0x4, scoped, tag = 'scoped memory for tpu_custom_call.1']
    #allocation5 [shape = 'u8[4096]{0}', space=vmem, size = 0x1000, scoped, tag = 'output window, operand 0, single buffered']
    %14 = vsyncpa [#allocation3], 0
    %15 = vsyncpa [#allocation4], 0
    // Predicated region
    $region2: #{tpu_custom_call.1} parent=1 // pred_check
      _
    $region3: #{tpu_custom_call.1} parent=1 // pred_check_branch
      %17 = sbr.rel (0) target = $region5
    $region4: #{tpu_custom_call.1} parent=1 // pred_region
      %s19 = ssub.s32 256, 256
      %20 = vsyncadd [#allocation3], %s19
      %s22 = sshll.u32 [#allocation2], 4
      %s23 = int_to_ptr.vmem [resolvable:$true] %s22
      %25 = dma.hbm_to_vmem [thread:$0]  %s0, 256, %s23, [#allocation3]
    $region5: #{tpu_custom_call.1} parent=1 // pred_fallthru
      _
    // Predicated region
    $region6: #{tpu_custom_call.1} parent=1 // pred_check
      _
    $region7: #{tpu_custom_call.1} parent=1 // pred_check_branch
      %27 = sbr.rel (0) target = $region9
    $region8: #{tpu_custom_call.1} parent=1 // pred_region
      _
    $region9: #{tpu_custom_call.1} parent=1 // pred_fallthru
      _
    // Predicated region
    $region10: #{tpu_custom_call.1} parent=1 // pred_check
      _
    $region11: #{tpu_custom_call.1} parent=1 // pred_check_branch
      %29 = sbr.rel (0) target = $region13
    $region12: #{tpu_custom_call.1} parent=1 // pred_region
      _
    $region13: #{tpu_custom_call.1} parent=1 // pred_fallthru
      _
    // Predicated region
    $region14: #{tpu_custom_call.1} parent=1 // pred_check
      _
    $region15: #{tpu_custom_call.1} parent=1 // pred_check_branch
      %31 = sbr.rel (0) target = $region17
    $region16: #{tpu_custom_call.1} parent=1 // pred_region
      _
    $region17: #{tpu_custom_call.1} parent=1 // pred_fallthru
      _
    // Predicated region
    $region18: #{tpu_custom_call.1} parent=1 // pred_check
      _
    $region19: #{tpu_custom_call.1} parent=1 // pred_check_branch
      %33 = sbr.rel (0) target = $region21
    $region20: #{tpu_custom_call.1} parent=1 // pred_region
      _
    $region21: #{tpu_custom_call.1} parent=1 // pred_fallthru
      _
    // Predicated region
    $region22: #{tpu_custom_call.1} parent=1 // pred_check
      _
    $region23: #{tpu_custom_call.1} parent=1 // pred_check_branch
      %35 = sbr.rel (0) target = $region25
    $region24: #{tpu_custom_call.1} parent=1 // pred_region
      _
    $region25: #{tpu_custom_call.1} parent=1 // pred_fallthru
      _
    // Predicated region
    $region26: #{tpu_custom_call.1} parent=1 // pred_check
      _
    $region27: #{tpu_custom_call.1} parent=1 // pred_check_branch
      %37 = sbr.rel (0) target = $region29
    $region28: #{tpu_custom_call.1} parent=1 // pred_region
      _
    $region29: #{tpu_custom_call.1} parent=1 // pred_fallthru
      _
    // Predicated region
    $region30: #{tpu_custom_call.1} parent=1 // pred_check
      _
    $region31: #{tpu_custom_call.1} parent=1 // pred_check_branch
      %39 = sbr.rel (0) target = $region33
    $region32: #{tpu_custom_call.1} parent=1 // pred_region
      _
    $region33: #{tpu_custom_call.1} parent=1 // pred_fallthru
      _
    // Predicated region
    $region34: #{tpu_custom_call.1} parent=1 // pred_check
      _
    $region35: #{tpu_custom_call.1} parent=1 // pred_check_branch
      %41 = sbr.rel (0) target = $region37
    $region36: #{tpu_custom_call.1} parent=1 // pred_region
      _
    $region37: #{tpu_custom_call.1} parent=1 // pred_fallthru
      _
    // Predicated region
    $region38: #{tpu_custom_call.1} parent=1 // pred_check
      _
    $region39: #{tpu_custom_call.1} parent=1 // pred_check_branch
      %43 = sbr.rel (0) target = $region41
    $region40: #{tpu_custom_call.1} parent=1 // pred_region
      %44 = dma.done [#allocation3], 256
    $region41: #{tpu_custom_call.1} parent=1 // pred_fallthru
      _
    %v46 = vld [vmem:[#allocation2] sm:$0xff]
    %v47 = vld [vmem:[#allocation2 + $0x8] sm:$0xff]
    %v48 = vpack.c.bf16 %v46, %v46
    %v49 = vpack.c.bf16 %v47, %v47
    %v50 = vld [vmem:[%s1] sm:$0xf]
    %v51 = vld [vmem:[%s1 + $0x4] sm:$0xf]
    %v52 = vld [vmem:[%s1 + $0x8] sm:$0xf]
    %v53 = vld [vmem:[%s1 + $0xc] sm:$0xf]
    %v54 = vld [vmem:[%s1 + $0x10] sm:$0xf]
    %v55 = vld [vmem:[%s1 + $0x14] sm:$0xf]
    %v56 = vld [vmem:[%s1 + $0x18] sm:$0xf]
    %v57 = vld [vmem:[%s1 + $0x1c] sm:$0xf]
    %v58 = vld [vmem:[%s1 + $0x20] sm:$0xf]
    %v59 = vld [vmem:[%s1 + $0x24] sm:$0xf]
    %v60 = vld [vmem:[%s1 + $0x28] sm:$0xf]
    %v61 = vld [vmem:[%s1 + $0x2c] sm:$0xf]
    %v62 = vld [vmem:[%s1 + $0x30] sm:$0xf]
    %v63 = vld [vmem:[%s1 + $0x34] sm:$0xf]
    %v64 = vld [vmem:[%s1 + $0x38] sm:$0xf]
    %v65 = vld [vmem:[%s1 + $0x3c] sm:$0xf]
    %v66 = vld [vmem:[%s1 + $0x40] sm:$0xf]
    %v67 = vld [vmem:[%s1 + $0x44] sm:$0xf]
    %v68 = vld [vmem:[%s2] sm:$0x1]
    %v70 = vlaneseq
    %v71 = vshrl.u32 %v70, 7
    %v72 = vsub.s32 0, %v71
    %v73 = vrot.slane %v68, %v72
    %v93 = vunpack.c.l.b16 %v50
    %v94 = vunpack.c.l.b16 %v51
    %v95 = vunpack.c.l.b16 %v52
    %v96 = vunpack.c.l.b16 %v53
    %v97 = vunpack.c.l.b16 %v54
    %v98 = vunpack.c.l.b16 %v55
    %v99 = vunpack.c.l.b16 %v56
    %v100 = vunpack.c.l.b16 %v57
    %v101 = vunpack.c.l.b16 %v58
    %v102 = vunpack.c.l.b16 %v59
    %v103 = vunpack.c.l.b16 %v60
    %v104 = vunpack.c.l.b16 %v61
    %v105 = vunpack.c.l.b16 %v62
    %v106 = vunpack.c.l.b16 %v63
    %v107 = vunpack.c.l.b16 %v64
    %v108 = vunpack.c.l.b16 %v65
    %v109 = vunpack.c.l.b16 %v66
    %v110 = vunpack.c.l.b16 %v67
    %v111 = vpack.c.b16 %v94, %v93
    %v112 = vpack.c.b16 %v96, %v95
    %v113 = vpack.c.b16 %v98, %v97
    %v114 = vpack.c.b16 %v100, %v99
    %v115 = vpack.c.b16 %v102, %v101
    %v116 = vpack.c.b16 %v104, %v103
    %v117 = vpack.c.b16 %v106, %v105
    %v118 = vpack.c.b16 %v108, %v107
    %v119 = vpack.c.b16 %v110, %v109
    %vm129 = vcmask 130048
    %v131 = vsel %vm129, %v49, 0
    %133 = vmatprep.subr.bf16.mxu0 0
    %134 = vmatpush1.bf16.msra.mxu0 %v111
    %135 = vmatprep.subr.bf16.mxu0 0
    %136 = vmatpush1.bf16.msra.mxu0 %v112
    %137 = vmatprep.subr.bf16.mxu0 0
    %138 = vmatpush1.bf16.msra.mxu0 %v113
    %139 = vmatprep.subr.bf16.mxu0 0
    %140 = vmatpush1.bf16.msra.mxu0 %v114
    %141 = vmatprep.subr.bf16.mxu0 0
    %142 = vmatpush1.bf16.msra.mxu0 %v115
    %143 = vmatprep.subr.bf16.mxu0 0
    %144 = vmatpush1.bf16.msra.mxu0 %v116
    %145 = vmatprep.subr.bf16.mxu0 0
    %146 = vmatpush1.bf16.msra.mxu0 %v117
    %147 = vmatprep.subr.bf16.mxu0 0
    %148 = vmatpush1.bf16.msra.mxu0 %v118
    %149 = vmatprep.subr.bf16.mxu0 0
    %150 = vmatpush1.bf16.msra.mxu0 %v119
    %151 = vmatprep.subr.bf16.mxu0 0
    %152 = vmatpush1.bf16.msra.mxu0 0
    %153 = vmatprep.subr.bf16.mxu0 0
    %154 = vmatpush1.bf16.msra.mxu0 0
    %155 = vmatprep.subr.bf16.mxu0 0
    %156 = vmatpush1.bf16.msra.mxu0 0
    %157 = vmatprep.subr.bf16.mxu0 0
    %158 = vmatpush1.bf16.msra.mxu0 0
    %159 = vmatprep.subr.bf16.mxu0 0
    %160 = vmatpush1.bf16.msra.mxu0 0
    %161 = vmatprep.subr.bf16.mxu0 0
    %162 = vmatpush1.bf16.msra.mxu0 0
    %163 = vmatprep.subr.bf16.mxu0 0
    %164 = vmatpush1.bf16.msra.mxu0 0
    %165 = vmatprep.mubr.bf16.mxu0 %v131
    %166 = vmatmul.mubr.bf16.gmra.mrb[0].mxu0 %v48
    %v167 = vpop.f32.mrb[0].mxu0
    %v168 = vadd.f32 %v73, %v167
    %v169 = vpop.f32.mrb[0].mxu0
    %v170 = vpop.f32.mrb[0].mxu0
    %v171 = vpop.f32.mrb[0].mxu0
    %172 = vdwg.mxu0
    %v173 = vmax.f32 %v168, 0.0
    %v174 = vpack.c.bf16 %v173, %v173
    %v175 = vld [vmem:[%s3] sm:$0xff]
    %v176 = vld [vmem:[%s3 + $0x8] sm:$0xff]
    %v177 = vld [vmem:[%s3 + $0x10] sm:$0xff]
    %v178 = vld [vmem:[%s3 + $0x18] sm:$0xff]
    %v179 = vld [vmem:[%s3 + $0x20] sm:$0xff]
    %v180 = vld [vmem:[%s3 + $0x28] sm:$0xff]
    %v181 = vld [vmem:[%s3 + $0x30] sm:$0xff]
    %v182 = vld [vmem:[%s3 + $0x38] sm:$0xff]
    %v183 = vld [vmem:[%s3 + $0x40] sm:$0xff]
    %v184 = vld [vmem:[%s3 + $0x48] sm:$0xff]
    %v185 = vld [vmem:[%s3 + $0x50] sm:$0xff]
    %v186 = vld [vmem:[%s3 + $0x58] sm:$0xff]
    %v187 = vld [vmem:[%s3 + $0x60] sm:$0xff]
    %v188 = vld [vmem:[%s3 + $0x68] sm:$0xff]
    %v189 = vld [vmem:[%s3 + $0x70] sm:$0xff]
    %v190 = vld [vmem:[%s3 + $0x78] sm:$0xff]
    %v191 = vld [vmem:[%s4] sm:$0x3]
    %v193 = vlaneseq
    %v194 = vshrl.u32 %v193, 7
    %v195 = vsub.s32 0, %v194
    %v196 = vrot.slane %v191, %v195
    %v197 = vlaneseq
    %v198 = vshrl.u32 %v197, 7
    %v199 = vsub.s32 1, %v198
    %v200 = vrot.slane %v191, %v199
    %v219 = vunpack.c.l.b16 %v175
    %v220 = vunpack.c.h.b16 %v175
    %v221 = vunpack.c.l.b16 %v176
    %v222 = vunpack.c.h.b16 %v176
    %v223 = vunpack.c.l.b16 %v177
    %v224 = vunpack.c.h.b16 %v177
    %v225 = vunpack.c.l.b16 %v178
    %v226 = vunpack.c.h.b16 %v178
    %v227 = vunpack.c.l.b16 %v179
    %v228 = vunpack.c.h.b16 %v179
    %v229 = vunpack.c.l.b16 %v180
    %v230 = vunpack.c.h.b16 %v180
    %v231 = vunpack.c.l.b16 %v181
    %v232 = vunpack.c.h.b16 %v181
    %v233 = vunpack.c.l.b16 %v182
    %v234 = vunpack.c.h.b16 %v182
    %v235 = vunpack.c.l.b16 %v183
    %v236 = vunpack.c.h.b16 %v183
    %v237 = vunpack.c.l.b16 %v184
    %v238 = vunpack.c.h.b16 %v184
    %v239 = vunpack.c.l.b16 %v185
    %v240 = vunpack.c.h.b16 %v185
    %v241 = vunpack.c.l.b16 %v186
    %v242 = vunpack.c.h.b16 %v186
    %v243 = vunpack.c.l.b16 %v187
    %v244 = vunpack.c.h.b16 %v187
    %v245 = vunpack.c.l.b16 %v188
    %v246 = vunpack.c.h.b16 %v188
    %v247 = vunpack.c.l.b16 %v189
    %v248 = vunpack.c.h.b16 %v189
    %v249 = vunpack.c.l.b16 %v190
    %v250 = vunpack.c.h.b16 %v190
    %v251 = vpack.c.b16 %v221, %v219
    %v252 = vpack.c.b16 %v222, %v220
    %v253 = vpack.c.b16 %v225, %v223
    %v254 = vpack.c.b16 %v226, %v224
    %v255 = vpack.c.b16 %v229, %v227
    %v256 = vpack.c.b16 %v230, %v228
    %v257 = vpack.c.b16 %v233, %v231
    %v258 = vpack.c.b16 %v234, %v232
    %v259 = vpack.c.b16 %v237, %v235
    %v260 = vpack.c.b16 %v238, %v236
    %v261 = vpack.c.b16 %v241, %v239
    %v262 = vpack.c.b16 %v242, %v240
    %v263 = vpack.c.b16 %v245, %v243
    %v264 = vpack.c.b16 %v246, %v244
    %v265 = vpack.c.b16 %v249, %v247
    %v266 = vpack.c.b16 %v250, %v248
    %283 = vmatprep.subr.bf16.mxu0 %v252
    %284 = vmatpush1.bf16.msra.mxu0 %v251
    %285 = vmatprep.subr.bf16.mxu0 %v254
    %286 = vmatpush1.bf16.msra.mxu0 %v253
    %287 = vmatprep.subr.bf16.mxu0 %v256
    %288 = vmatpush1.bf16.msra.mxu0 %v255
    %289 = vmatprep.subr.bf16.mxu0 %v258
    %290 = vmatpush1.bf16.msra.mxu0 %v257
    %291 = vmatprep.subr.bf16.mxu0 %v260
    %292 = vmatpush1.bf16.msra.mxu0 %v259
    %293 = vmatprep.subr.bf16.mxu0 %v262
    %294 = vmatpush1.bf16.msra.mxu0 %v261
    %295 = vmatprep.subr.bf16.mxu0 %v264
    %296 = vmatpush1.bf16.msra.mxu0 %v263
    %297 = vmatprep.subr.bf16.mxu0 %v266
    %298 = vmatpush1.bf16.msra.mxu0 %v265
    %299 = vmatprep.subr.bf16.mxu0 0
    %300 = vmatpush1.bf16.msra.mxu0 0
    %301 = vmatprep.subr.bf16.mxu0 0
    %302 = vmatpush1.bf16.msra.mxu0 0
    %303 = vmatprep.subr.bf16.mxu0 0
    %304 = vmatpush1.bf16.msra.mxu0 0
    %305 = vmatprep.subr.bf16.mxu0 0
    %306 = vmatpush1.bf16.msra.mxu0 0
    %307 = vmatprep.subr.bf16.mxu0 0
    %308 = vmatpush1.bf16.msra.mxu0 0
    %309 = vmatprep.subr.bf16.mxu0 0
    %310 = vmatpush1.bf16.msra.mxu0 0
    %311 = vmatprep.subr.bf16.mxu0 0
    %312 = vmatpush1.bf16.msra.mxu0 0
    %313 = vmatprep.subr.bf16.mxu0 0
    %314 = vmatpush1.bf16.msra.mxu0 0
    %315 = vmatprep.mubr.bf16.mxu0 0
    %316 = vmatmul.mubr.bf16.gmra.mrb[0].mxu0 %v174
    %v317 = vpop.f32.mrb[0].mxu0
    %v318 = vadd.f32 %v196, %v317
    %v319 = vpop.f32.mrb[0].mxu0
    %v320 = vadd.f32 %v200, %v319
    %v321 = vpop.f32.mrb[0].mxu0
    %v322 = vpop.f32.mrb[0].mxu0
    %323 = vdwg.mxu0
    %v324 = vmax.f32 %v318, 0.0
    %v325 = vmax.f32 %v320, 0.0
    %v326 = vpack.c.bf16 %v324, %v324
    %v327 = vpack.c.bf16 %v325, %v325
    %v328 = vld [vmem:[%s5] sm:$0xf]
    %v329 = vld [vmem:[%s5 + $0x4] sm:$0xf]
    %v330 = vld [vmem:[%s5 + $0x8] sm:$0xf]
    %v331 = vld [vmem:[%s5 + $0xc] sm:$0xf]
    %v332 = vld [vmem:[%s5 + $0x10] sm:$0xf]
    %v333 = vld [vmem:[%s5 + $0x14] sm:$0xf]
    %v334 = vld [vmem:[%s5 + $0x18] sm:$0xf]
    %v335 = vld [vmem:[%s5 + $0x1c] sm:$0xf]
    %v336 = vld [vmem:[%s5 + $0x20] sm:$0xf]
    %v337 = vld [vmem:[%s5 + $0x24] sm:$0xf]
    %v338 = vld [vmem:[%s5 + $0x28] sm:$0xf]
    %v339 = vld [vmem:[%s5 + $0x2c] sm:$0xf]
    %v340 = vld [vmem:[%s5 + $0x30] sm:$0xf]
    %v341 = vld [vmem:[%s5 + $0x34] sm:$0xf]
    %v342 = vld [vmem:[%s5 + $0x38] sm:$0xf]
    %v343 = vld [vmem:[%s5 + $0x3c] sm:$0xf]
    %v344 = vld [vmem:[%s5 + $0x40] sm:$0xf]
    %v345 = vld [vmem:[%s5 + $0x44] sm:$0xf]
    %v346 = vld [vmem:[%s5 + $0x48] sm:$0xf]
    %v347 = vld [vmem:[%s5 + $0x4c] sm:$0xf]
    %v348 = vld [vmem:[%s5 + $0x50] sm:$0xf]
    %v349 = vld [vmem:[%s5 + $0x54] sm:$0xf]
    %v350 = vld [vmem:[%s5 + $0x58] sm:$0xf]
    %v351 = vld [vmem:[%s5 + $0x5c] sm:$0xf]
    %v352 = vld [vmem:[%s5 + $0x60] sm:$0xf]
    %v353 = vld [vmem:[%s5 + $0x64] sm:$0xf]
    %v354 = vld [vmem:[%s5 + $0x68] sm:$0xf]
    %v355 = vld [vmem:[%s5 + $0x6c] sm:$0xf]
    %v356 = vld [vmem:[%s5 + $0x70] sm:$0xf]
    %v357 = vld [vmem:[%s5 + $0x74] sm:$0xf]
    %v358 = vld [vmem:[%s5 + $0x78] sm:$0xf]
    %v359 = vld [vmem:[%s5 + $0x7c] sm:$0xf]
    %v360 = vld [vmem:[%s6] sm:$0x1]
    %v362 = vlaneseq
    %v363 = vshrl.u32 %v362, 7
    %v364 = vsub.s32 0, %v363
    %v365 = vrot.slane %v360, %v364
    %v399 = vunpack.c.l.b16 %v328
    %v400 = vunpack.c.l.b16 %v329
    %v401 = vunpack.c.l.b16 %v330
    %v402 = vunpack.c.l.b16 %v331
    %v403 = vunpack.c.l.b16 %v332
    %v404 = vunpack.c.l.b16 %v333
    %v405 = vunpack.c.l.b16 %v334
    %v406 = vunpack.c.l.b16 %v335
    %v407 = vunpack.c.l.b16 %v336
    %v408 = vunpack.c.l.b16 %v337
    %v409 = vunpack.c.l.b16 %v338
    %v410 = vunpack.c.l.b16 %v339
    %v411 = vunpack.c.l.b16 %v340
    %v412 = vunpack.c.l.b16 %v341
    %v413 = vunpack.c.l.b16 %v342
    %v414 = vunpack.c.l.b16 %v343
    %v415 = vunpack.c.l.b16 %v344
    %v416 = vunpack.c.l.b16 %v345
    %v417 = vunpack.c.l.b16 %v346
    %v418 = vunpack.c.l.b16 %v347
    %v419 = vunpack.c.l.b16 %v348
    %v420 = vunpack.c.l.b16 %v349
    %v421 = vunpack.c.l.b16 %v350
    %v422 = vunpack.c.l.b16 %v351
    %v423 = vunpack.c.l.b16 %v352
    %v424 = vunpack.c.l.b16 %v353
    %v425 = vunpack.c.l.b16 %v354
    %v426 = vunpack.c.l.b16 %v355
    %v427 = vunpack.c.l.b16 %v356
    %v428 = vunpack.c.l.b16 %v357
    %v429 = vunpack.c.l.b16 %v358
    %v430 = vunpack.c.l.b16 %v359
    %v431 = vpack.c.b16 %v400, %v399
    %v432 = vpack.c.b16 %v402, %v401
    %v433 = vpack.c.b16 %v404, %v403
    %v434 = vpack.c.b16 %v406, %v405
    %v435 = vpack.c.b16 %v408, %v407
    %v436 = vpack.c.b16 %v410, %v409
    %v437 = vpack.c.b16 %v412, %v411
    %v438 = vpack.c.b16 %v414, %v413
    %v439 = vpack.c.b16 %v416, %v415
    %v440 = vpack.c.b16 %v418, %v417
    %v441 = vpack.c.b16 %v420, %v419
    %v442 = vpack.c.b16 %v422, %v421
    %v443 = vpack.c.b16 %v424, %v423
    %v444 = vpack.c.b16 %v426, %v425
    %v445 = vpack.c.b16 %v428, %v427
    %v446 = vpack.c.b16 %v430, %v429
    %463 = vmatprep.subr.bf16.mxu0 0
    %464 = vmatpush1.bf16.msra.mxu0 %v431
    %465 = vmatprep.subr.bf16.mxu0 0
    %466 = vmatpush1.bf16.msra.mxu0 %v432
    %467 = vmatprep.subr.bf16.mxu0 0
    %468 = vmatpush1.bf16.msra.mxu0 %v433
    %469 = vmatprep.subr.bf16.mxu0 0
    %470 = vmatpush1.bf16.msra.mxu0 %v434
    %471 = vmatprep.subr.bf16.mxu0 0
    %472 = vmatpush1.bf16.msra.mxu0 %v435
    %473 = vmatprep.subr.bf16.mxu0 0
    %474 = vmatpush1.bf16.msra.mxu0 %v436
    %475 = vmatprep.subr.bf16.mxu0 0
    %476 = vmatpush1.bf16.msra.mxu0 %v437
    %477 = vmatprep.subr.bf16.mxu0 0
    %478 = vmatpush1.bf16.msra.mxu0 %v438
    %479 = vmatprep.subr.bf16.mxu0 0
    %480 = vmatpush1.bf16.msra.mxu0 %v439
    %481 = vmatprep.subr.bf16.mxu0 0
    %482 = vmatpush1.bf16.msra.mxu0 %v440
    %483 = vmatprep.subr.bf16.mxu0 0
    %484 = vmatpush1.bf16.msra.mxu0 %v441
    %485 = vmatprep.subr.bf16.mxu0 0
    %486 = vmatpush1.bf16.msra.mxu0 %v442
    %487 = vmatprep.subr.bf16.mxu0 0
    %488 = vmatpush1.bf16.msra.mxu0 %v443
    %489 = vmatprep.subr.bf16.mxu0 0
    %490 = vmatpush1.bf16.msra.mxu0 %v444
    %491 = vmatprep.subr.bf16.mxu0 0
    %492 = vmatpush1.bf16.msra.mxu0 %v445
    %493 = vmatprep.subr.bf16.mxu0 0
    %494 = vmatpush1.bf16.msra.mxu0 %v446
    %495 = vmatprep.mubr.bf16.mxu0 %v327
    %496 = vmatmul.mubr.bf16.gmra.mrb[0].mxu0 %v326
    %v497 = vpop.f32.mrb[0].mxu0
    %v498 = vadd.f32 %v365, %v497
    %v499 = vpop.f32.mrb[0].mxu0
    %v500 = vpop.f32.mrb[0].mxu0
    %v501 = vpop.f32.mrb[0].mxu0
    %502 = vdwg.mxu0
    %v503 = vmax.f32 %v498, 0.0
    %v504 = vpack.c.bf16 %v503, %v503
    %v505 = vld [vmem:[%s7] sm:$0xf]
    %v506 = vld [vmem:[%s8] sm:$0xff]
    %508 = vset.pattern.permute.xlu0 0
    %509 = vperm.xlu0 %508, %v506
    %v510 = vpop.permute.xlu0 %509
    %vm512 = vcmask 523264
    %v514 = vsel %vm512, %v505, 0
    %v517 = vsel %vm512, %v504, 0
    %519 = vmatprep.subr.bf16.mxu0 0
    %520 = vmatpush1.bf16.xpose.msra.mxu0 %v517
    %521 = vmatprep.subr.bf16.mxu0 0
    %522 = vmatpush1.bf16.xpose.msra.mxu0 0
    %523 = vmatprep.subr.bf16.mxu0 0
    %524 = vmatpush1.bf16.xpose.msra.mxu0 0
    %525 = vmatprep.subr.bf16.mxu0 0
    %526 = vmatpush1.bf16.xpose.msra.mxu0 0
    %527 = vmatprep.subr.bf16.mxu0 0
    %528 = vmatpush1.bf16.xpose.msra.mxu0 0
    %529 = vmatprep.subr.bf16.mxu0 0
    %530 = vmatpush1.bf16.xpose.msra.mxu0 0
    %531 = vmatprep.subr.bf16.mxu0 0
    %532 = vmatpush1.bf16.xpose.msra.mxu0 0
    %533 = vmatprep.subr.bf16.mxu0 0
    %534 = vmatpush1.bf16.xpose.msra.mxu0 0
    %535 = vmatprep.subr.bf16.mxu0 0
    %536 = vmatpush1.bf16.xpose.msra.mxu0 0
    %537 = vmatprep.subr.bf16.mxu0 0
    %538 = vmatpush1.bf16.xpose.msra.mxu0 0
    %539 = vmatprep.subr.bf16.mxu0 0
    %540 = vmatpush1.bf16.xpose.msra.mxu0 0
    %541 = vmatprep.subr.bf16.mxu0 0
    %542 = vmatpush1.bf16.xpose.msra.mxu0 0
    %543 = vmatprep.subr.bf16.mxu0 0
    %544 = vmatpush1.bf16.xpose.msra.mxu0 0
    %545 = vmatprep.subr.bf16.mxu0 0
    %546 = vmatpush1.bf16.xpose.msra.mxu0 0
    %547 = vmatprep.subr.bf16.mxu0 0
    %548 = vmatpush1.bf16.xpose.msra.mxu0 0
    %549 = vmatprep.subr.bf16.mxu0 0
    %550 = vmatpush1.bf16.xpose.msra.mxu0 0
    %551 = vmatprep.mubr.bf16.mxu0 0
    %552 = vmatmul.mubr.bf16.gmra.mrb[0].mxu0 %v514
    %v553 = vpop.f32.mrb[0].mxu0
    %v554 = vadd.f32 %v510, %v553
    %v555 = vpop.f32.mrb[0].mxu0
    %v556 = vpop.f32.mrb[0].mxu0
    %v557 = vpop.f32.mrb[0].mxu0
    %558 = vdwg.mxu0
    %vm559 = vcmask 64512
    %560 = vst.msk [vmem:[#allocation5] sm:$0xff] %vm559, %v554
    // Predicated region
    $region42: #{tpu_custom_call.1} parent=1 // pred_check
      _
    $region43: #{tpu_custom_call.1} parent=1 // pred_check_branch
      %562 = sbr.rel (0) target = $region45
    $region44: #{tpu_custom_call.1} parent=1 // pred_region
      %s564 = ssub.s32 128, 128
      %565 = vsyncadd [#allocation4], %s564
      %s567 = sshll.u32 [#allocation5], 4
      %s568 = int_to_ptr.vmem [resolvable:$true] %s567
      %570 = dma.vmem_to_hbm [thread:$0]  %s568, 128, %s9, [#allocation4]
    $region45: #{tpu_custom_call.1} parent=1 // pred_fallthru
      _
    // Predicated region
    $region46: #{tpu_custom_call.1} parent=1 // pred_check
      _
    $region47: #{tpu_custom_call.1} parent=1 // pred_check_branch
      %572 = sbr.rel (0) target = $region49
    $region48: #{tpu_custom_call.1} parent=1 // pred_region
      %573 = dma.done [#allocation4], 128
    $region49: #{tpu_custom_call.1} parent=1 // pred_fallthru
      _
    %574 = vsyncpa [#allocation3], 1
    %575 = vsyncpa [#allocation4], 1

</llo_original>
